<compile_context>
chip_gen: v7x
topology: tpu7x:2x2x1
jax: 0.10.0
libtpu: 0.0.40
codegen_flags: <defaults>
</compile_context>

<pallas_src>
import functools

import jax
import jax.numpy as jnp
from jax.experimental import pallas as pl
from jax.experimental.pallas import tpu as pltpu


def _round_up(x, m):
    return ((x + m - 1) // m) * m


# --------------------------- kernels ---------------------------

def _linear_kernel_single_k(x_ref, w_ref, b_ref, o_ref):
    # x:[tb,tk]  w:[tk,tn]  b:[1,tn]  o:[tb,tn] — full K in a single block.
    o_ref[...] = (
        jnp.dot(x_ref[...], w_ref[...], preferred_element_type=jnp.float32)
        + b_ref[...]
    ).astype(o_ref.dtype)


def _linear_kernel_multi_k(x_ref, w_ref, b_ref, o_ref):
    # The f32 output block is resident across the K grid axis; accumulate in place.
    k = pl.program_id(2)

    @pl.when(k == 0)
    def _():
        o_ref[...] = jnp.zeros_like(o_ref)

    o_ref[...] += jnp.dot(x_ref[...], w_ref[...],
                          preferred_element_type=jnp.float32)

    @pl.when(k == pl.num_programs(2) - 1)
    def _():
        o_ref[...] += b_ref[...]


# ----------------------- parameter prep (one-time) -----------------------

def prepare_hac_params(weight, bias, *, compute_dtype=jnp.bfloat16,
                       max_tn=512, max_tk=1024):
    """One-time prep: pad W/b, transpose W to [K, N], cast to compute dtype.

    weight: [O, F] (PyTorch nn.Linear layout), bias: [O].
    Returns (w_kn, b_row, cfg):
      w_kn : [f_pad, o_pad] compute_dtype
      b_row: [1, o_pad] float32
      cfg  : static ints for the jitted forward.
    """
    O, F = weight.shape
    assert bias.shape == (O,)

    tn = min(_round_up(O, 128), max_tn)
    o128 = _round_up(O, 128)
    # Guarantee >=2 output tiles when O allows so the "parallel" O axis can feed
    # both TensorCores on v7x even when the batch collapses to a single tile.
    if o128 >= 256:
        tn = min(tn, _round_up(o128 // 2, 128))
    o_pad = _round_up(O, tn)

    tk = min(_round_up(F, 128), max_tk)
    f_pad = _round_up(F, tk)

    # Pad + transpose + cast ONCE, off the per-call path (zero padding is exact).
    w_kn = jnp.pad(weight.astype(jnp.float32),
                   ((0, o_pad - O), (0, f_pad - F))).T.astype(compute_dtype)
    b_row = jnp.pad(bias.astype(jnp.float32), (0, o_pad - O)).reshape(1, o_pad)

    cfg = {"out_dim": O, "in_dim": F, "tn": tn, "tk": tk}
    return w_kn, b_row, cfg


# ----------------------------- forward -----------------------------

@functools.partial(jax.jit, static_argnames=("out_dim", "tn", "tk", "max_tb"))
def hac_forward(x, w_kn, b_row, *, out_dim, tn, tk, max_tb=256):
    """HAC.forward(x) == nn.Linear(out_features, num_genus+num_species)(x).

    x    : [B, F] float32
    w_kn : [f_pad, o_pad] prepared weight ([K, N] layout, compute dtype)
    b_row: [1, o_pad] float32 bias
    returns [B, out_dim] float32 logits
    """
    B, F = x.shape
    f_pad, o_pad = w_kn.shape
    assert F <= f_pad and o_pad % tn == 0 and f_pad % tk == 0
    compute_dtype = w_kn.dtype

    tb = min(_round_up(B, 8), max_tb)
    b_pad = _round_up(B, tb)

    xp = x.astype(compute_dtype)
    if (b_pad, f_pad) != (B, F):
        xp = jnp.pad(xp, ((0, b_pad - B), (0, f_pad - F)))

    nb, nn, nk = b_pad // tb, o_pad // tn, f_pad // tk
    itemsize = jnp.dtype(compute_dtype).itemsize

    # VMEM budget from actual tile bytes (double-buffered inputs + output + slack),
    # bounded so it stays inside v7x's 64 MiB while using v5e/v6e comfortably.
    in_bytes = itemsize * (tb * tk + tk * tn)
    out_bytes = 4 * (tb * tn + tn)
    vmem_limit_bytes = int(min(
        56 << 20,
        max(16 << 20, 3 * in_bytes + 2 * out_bytes + (4 << 20)),
    ))

    cost = pl.CostEstimate(
        flops=2 * b_pad * f_pad * o_pad,
        transcendentals=0,
        bytes_accessed=int(itemsize * (b_pad * f_pad * nn + f_pad * o_pad * nb)
                           + 4 * (b_pad * o_pad + o_pad * nb)),
    )

    if nk == 1:
        grid = (nb, nn)
        in_specs = [
            pl.BlockSpec((tb, tk), lambda i, j: (i, 0)),   # x
            pl.BlockSpec((tk, tn), lambda i, j: (0, j)),   # W ([K, N])
            pl.BlockSpec((1, tn), lambda i, j: (0, j)),    # bias
        ]
        out_specs = pl.BlockSpec((tb, tn), lambda i, j: (i, j))
        kernel = _linear_kernel_single_k
        dims = ("parallel", "parallel")
    else:
        grid = (nb, nn, nk)
        in_specs = [
            pl.BlockSpec((tb, tk), lambda i, j, k: (i, k)),   # x
            pl.BlockSpec((tk, tn), lambda i, j, k: (k, j)),   # W ([K, N])
            pl.BlockSpec((1, tn), lambda i, j, k: (0, j)),    # bias
        ]
        out_specs = pl.BlockSpec((tb, tn), lambda i, j, k: (i, j))
        kernel = _linear_kernel_multi_k
        dims = ("parallel", "parallel", "arbitrary")

    out = pl.pallas_call(
        kernel,
        out_shape=jax.ShapeDtypeStruct((b_pad, o_pad), jnp.float32),
        grid_spec=pltpu.PrefetchScalarGridSpec(
            num_scalar_prefetch=0,
            grid=grid,
            in_specs=in_specs,
            out_specs=out_specs,
        ),
        compiler_params=pltpu.CompilerParams(
            dimension_semantics=dims,
            vmem_limit_bytes=vmem_limit_bytes,
        ),
        cost_estimate=cost,
    )(xp, w_kn, b_row)

    return out[:B, :out_dim]


def hac_mask_logits(logits, num_genus):
    """HAC.mask_logits — elementwise multiply by float masks (matches torch)."""
    O = logits.shape[1]
    genus_mask = (jnp.arange(O) < num_genus).astype(logits.dtype)[None, :]
    return logits * genus_mask, logits * (1.0 - genus_mask)


# ------------------------------ demo / check ------------------------------

if __name__ == "__main__":
    batch = 4
    out_features = 32            # hidden / feature dim fed to the head
    num_genus = 8
    num_species = 24
    out_shape = num_genus + num_species   # = 32

    key = jax.random.PRNGKey(0)
    kx, kw, kb = jax.random.split(key, 3)
    x = jax.random.normal(kx, (batch, out_features), dtype=jnp.float32)
    weight = jax.random.normal(kw, (out_shape, out_features), dtype=jnp.float32) * 0.1
    bias = jax.random.normal(kb, (out_shape,), dtype=jnp.float32) * 0.01

    # --- default bf16 datapath (f32 accumulation on the MXU), single-K fast path ---
    w_kn, b_row, cfg = prepare_hac_params(weight, bias)      # done ONCE, off hot path
    logits = jax.block_until_ready(
        hac_forward(x, w_kn, b_row,
                    out_dim=cfg["out_dim"], tn=cfg["tn"], tk=cfg["tk"]))

    ref_bf16 = (x.astype(jnp.bfloat16).astype(jnp.float32)
                @ weight.astype(jnp.bfloat16).astype(jnp.float32).T) + bias
    assert jnp.allclose(logits, ref_bf16, atol=1e-4, rtol=1e-4), "bf16-path mismatch"
    ref_f32 = x @ weight.T + bias
    assert jnp.allclose(logits, ref_f32, atol=3e-2, rtol=3e-2), "bf16 drift vs f32 ref"

    # --- f32 datapath, also exercises the K-reduction grid axis and multi-tile O ---
    F2, O2 = 256, 256
    x2 = jax.random.normal(kx, (batch, F2), dtype=jnp.float32)
    w2 = jax.random.normal(kw, (O2, F2), dtype=jnp.float32) * 0.05
    b2 = jax.random.normal(kb, (O2,), dtype=jnp.float32) * 0.01
    w2_kn, b2_row, cfg2 = prepare_hac_params(
        w2, b2, compute_dtype=jnp.float32, max_tn=128, max_tk=128)
    logits2 = jax.block_until_ready(
        hac_forward(x2, w2_kn, b2_row,
                    out_dim=cfg2["out_dim"], tn=cfg2["tn"], tk=cfg2["tk"]))
    ref2 = jnp.dot(x2, w2.T, precision=jax.lax.Precision.HIGHEST) + b2
    assert jnp.allclose(logits2, ref2, atol=2e-3, rtol=2e-3), "f32 K-path mismatch"

    # Exercise the (non-kernel) mask helper once for completeness.
    g_logits, s_logits = hac_mask_logits(logits, num_genus)
    _ = jax.block_until_ready((g_logits, s_logits))

    # TODO(synk): loss_fn (CrossEntropyLoss) / pred_fn argmax are training/eval glue,
    # intentionally left out of the kernel.

    print("KERNEL_OK")
</pallas_src>

<mosaic_0001>
module attributes {stable_mosaic.version = 11 : i64} {
  func.func @_linear_kernel_single_k(%arg0: i32, %arg1: i32, %arg2: memref<8x128xbf16, #tpu.memory_space<vmem>>, %arg3: memref<128x128xbf16, #tpu.memory_space<vmem>>, %arg4: memref<1x128xf32, #tpu.memory_space<vmem>>, %arg5: memref<8x128xf32, #tpu.memory_space<vmem>>) attributes {dimension_semantics = [#tpu.dimension_semantics<parallel>, #tpu.dimension_semantics<parallel>], iteration_bounds = array<i64: 1, 1>, scalar_prefetch = 0 : i64, scratch_operands = 0 : i64, tpu.core_type = #tpu.core_type<tc>, window_params = [{transform_indices = @transform_0, window_bounds = array<i64: 8, 128>}, {transform_indices = @transform_1, window_bounds = array<i64: 128, 128>}, {transform_indices = @transform_2, window_bounds = array<i64: 1, 128>}, {transform_indices = @transform_3, window_bounds = array<i64: 8, 128>}]} {
    %c0 = arith.constant 0 : index
    %c0_0 = arith.constant 0 : index
    %0 = vector.load %arg2[%c0, %c0_0] : memref<8x128xbf16, #tpu.memory_space<vmem>>, vector<8x128xbf16>
    %c0_1 = arith.constant 0 : index
    %c0_2 = arith.constant 0 : index
    %1 = vector.load %arg3[%c0_1, %c0_2] : memref<128x128xbf16, #tpu.memory_space<vmem>>, vector<128x128xbf16>
    %cst = arith.constant dense<0.000000e+00> : vector<8x128xf32>
    %2 = tpu.matmul %0, %1, %cst {dimension_numbers = #tpu.dot_dimension_numbers<[1], [0], [0], [1], [0, 0, 1, 1], [], []>} : vector<8x128xbf16>, vector<128x128xbf16>, vector<8x128xf32> -> vector<8x128xf32>
    %c0_3 = arith.constant 0 : index
    %c0_4 = arith.constant 0 : index
    %3 = vector.load %arg4[%c0_3, %c0_4] : memref<1x128xf32, #tpu.memory_space<vmem>>, vector<1x128xf32>
    %4 = vector.broadcast %3 : vector<1x128xf32> to vector<8x128xf32>
    %5 = arith.addf %2, %4 : vector<8x128xf32>
    %c0_5 = arith.constant 0 : index
    %c0_6 = arith.constant 0 : index
    %6 = vector.load %arg5[%c0_5, %c0_6] : memref<8x128xf32, #tpu.memory_space<vmem>>, vector<8x128xf32>
    tpu.vector_store %arg5[%c0_5, %c0_6], %5 {strides = array<i32>} : memref<8x128xf32, #tpu.memory_space<vmem>>, vector<8x128xf32>,
    return
  }
  func.func @transform_0(%arg0: i32, %arg1: i32) -> (i32, i32) {
    %c0_i32 = arith.constant 0 : i32
    %c0_i32_0 = arith.constant 0 : i32
    return %arg0, %c0_i32 : i32, i32
  }
  func.func @transform_1(%arg0: i32, %arg1: i32) -> (i32, i32) {
    %c0_i32 = arith.constant 0 : i32
    %c0_i32_0 = arith.constant 0 : i32
    return %c0_i32, %arg1 : i32, i32
  }
  func.func @transform_2(%arg0: i32, %arg1: i32) -> (i32, i32) {
    %c0_i32 = arith.constant 0 : i32
    %c0_i32_0 = arith.constant 0 : i32
    return %c0_i32, %arg1 : i32, i32
  }
  func.func @transform_3(%arg0: i32, %arg1: i32) -> (i32, i32) {
    %c0_i32 = arith.constant 0 : i32
    return %arg0, %arg1 : i32, i32
  }
}

</mosaic_0001>

<llo_original>
// kernel: hac_forward.1
$region0: #{hac_forward.1}
  #allocation0 [shape = 'u32[]', space=smem, size = 0x4, offset = 0x4, fixed_abs, tag = 'smem constant byte address 0x4 - core index']
  #allocation1 [shape = 'u32[144,128]{1,0:T(1,128)}', space=vmem, size = 0x12000, scoped, tag = 'internal scratch']
  %s0 = inlined_call_operand.vmem [shape: bf16[8,128], index: 0, kind: input, shape index: {}]
  %s1 = inlined_call_operand.hbm [shape: bf16[128,128], index: 1, kind: input, shape index: {}]
  %s2 = inlined_call_operand.vmem [shape: f32[1,128], index: 2, kind: input, shape index: {}]
  %s3 = inlined_call_operand.vmem [shape: f32[8,128], index: 3, kind: output, shape index: {}]
  %s4 = sld [smem:[#allocation0]]
  $region26: #{hac_forward.1} parent=0
    _
  %s6 = ssub.s32 1, %s4
  %s7 = scalar_select 0, %s6, %s4
  $region1: #{hac_forward.1} parent=0
    #allocation2 [shape = 'u8[32768]{0}', space=vmem, size = 0x8000, scoped, tag = 'input window, operand 1, single buffered']
    #allocation3 [shape = 's32[1]{0}', space=sflag, size = 0x4, scoped, tag = 'scoped memory for hac_forward.1']
    %8 = vsyncpa [#allocation3], 0
    // Predicated region
    $region2: #{hac_forward.1} parent=1 // pred_check
      _
    $region3: #{hac_forward.1} parent=1 // pred_check_branch
      %10 = sbr.rel (0) target = $region5
    $region4: #{hac_forward.1} parent=1 // pred_region
      _
    $region5: #{hac_forward.1} parent=1 // pred_fallthru
      _
    // Predicated region
    $region6: #{hac_forward.1} parent=1 // pred_check
      _
    $region7: #{hac_forward.1} parent=1 // pred_check_branch
      %12 = sbr.rel (0) target = $region9
    $region8: #{hac_forward.1} parent=1 // pred_region
      %s14 = ssub.s32 1024, 1024
      %15 = vsyncadd [#allocation3], %s14
      %s16 = sshll.u32 [#allocation2], 4
      %s17 = int_to_ptr.vmem [resolvable:$true] %s16
      %22 = dma.hbm_to_vmem [thread:$0]  %s1, 1024, %s17, [#allocation3], 64, 64, 4
    $region9: #{hac_forward.1} parent=1 // pred_fallthru
      _
    // Predicated region
    $region10: #{hac_forward.1} parent=1 // pred_check
      _
    $region11: #{hac_forward.1} parent=1 // pred_check_branch
      %24 = sbr.rel (0) target = $region13
    $region12: #{hac_forward.1} parent=1 // pred_region
      _
    $region13: #{hac_forward.1} parent=1 // pred_fallthru
      _
    // Predicated region
    $region14: #{hac_forward.1} parent=1 // pred_check
      _
    $region15: #{hac_forward.1} parent=1 // pred_check_branch
      %26 = sbr.rel (0) target = $region17
    $region16: #{hac_forward.1} parent=1 // pred_region
      %27 = dma.done [#allocation3], 1024
    $region17: #{hac_forward.1} parent=1 // pred_fallthru
      _
    %v29 = vld [vmem:[%s0] sm:$0xf]
    %v30 = vld [vmem:[#allocation2] sm:$0xf]
    %v31 = vld [vmem:[#allocation2 + $0x4] sm:$0xf]
    %v32 = vld [vmem:[#allocation2 + $0x8] sm:$0xf]
    %v33 = vld [vmem:[#allocation2 + $0xc] sm:$0xf]
    %v34 = vld [vmem:[#allocation2 + $0x10] sm:$0xf]
    %v35 = vld [vmem:[#allocation2 + $0x14] sm:$0xf]
    %v36 = vld [vmem:[#allocation2 + $0x18] sm:$0xf]
    %v37 = vld [vmem:[#allocation2 + $0x1c] sm:$0xf]
    %v38 = vld [vmem:[#allocation2 + $0x20] sm:$0xf]
    %v39 = vld [vmem:[#allocation2 + $0x24] sm:$0xf]
    %v40 = vld [vmem:[#allocation2 + $0x28] sm:$0xf]
    %v41 = vld [vmem:[#allocation2 + $0x2c] sm:$0xf]
    %v42 = vld [vmem:[#allocation2 + $0x30] sm:$0xf]
    %v43 = vld [vmem:[#allocation2 + $0x34] sm:$0xf]
    %v44 = vld [vmem:[#allocation2 + $0x38] sm:$0xf]
    %v45 = vld [vmem:[#allocation2 + $0x3c] sm:$0xf]
    %v46 = vld [vmem:[%s2] sm:$0x1]
    %v48 = vlaneseq
    %v49 = vshrl.u32 %v48, 7
    %v50 = vsub.s32 0, %v49
    %v51 = vrot.slane %v46, %v50
    %v69 = vunpack.c.l.b16 %v30
    %v70 = vunpack.c.l.b16 %v31
    %v71 = vunpack.c.l.b16 %v32
    %v72 = vunpack.c.l.b16 %v33
    %v73 = vunpack.c.l.b16 %v34
    %v74 = vunpack.c.l.b16 %v35
    %v75 = vunpack.c.l.b16 %v36
    %v76 = vunpack.c.l.b16 %v37
    %v77 = vunpack.c.l.b16 %v38
    %v78 = vunpack.c.l.b16 %v39
    %v79 = vunpack.c.l.b16 %v40
    %v80 = vunpack.c.l.b16 %v41
    %v81 = vunpack.c.l.b16 %v42
    %v82 = vunpack.c.l.b16 %v43
    %v83 = vunpack.c.l.b16 %v44
    %v84 = vunpack.c.l.b16 %v45
    %v85 = vpack.c.b16 %v70, %v69
    %v86 = vpack.c.b16 %v72, %v71
    %v87 = vpack.c.b16 %v74, %v73
    %v88 = vpack.c.b16 %v76, %v75
    %v89 = vpack.c.b16 %v78, %v77
    %v90 = vpack.c.b16 %v80, %v79
    %v91 = vpack.c.b16 %v82, %v81
    %v92 = vpack.c.b16 %v84, %v83
    %101 = vmatprep.subr.bf16.mxu0 0
    %102 = vmatpush1.bf16.msra.mxu0 %v85
    %103 = vmatprep.subr.bf16.mxu0 0
    %104 = vmatpush1.bf16.msra.mxu0 %v86
    %105 = vmatprep.subr.bf16.mxu0 0
    %106 = vmatpush1.bf16.msra.mxu0 %v87
    %107 = vmatprep.subr.bf16.mxu0 0
    %108 = vmatpush1.bf16.msra.mxu0 %v88
    %109 = vmatprep.subr.bf16.mxu0 0
    %110 = vmatpush1.bf16.msra.mxu0 %v89
    %111 = vmatprep.subr.bf16.mxu0 0
    %112 = vmatpush1.bf16.msra.mxu0 %v90
    %113 = vmatprep.subr.bf16.mxu0 0
    %114 = vmatpush1.bf16.msra.mxu0 %v91
    %115 = vmatprep.subr.bf16.mxu0 0
    %116 = vmatpush1.bf16.msra.mxu0 %v92
    %117 = vmatprep.subr.bf16.mxu0 0
    %118 = vmatpush1.bf16.msra.mxu0 0
    %119 = vmatprep.subr.bf16.mxu0 0
    %120 = vmatpush1.bf16.msra.mxu0 0
    %121 = vmatprep.subr.bf16.mxu0 0
    %122 = vmatpush1.bf16.msra.mxu0 0
    %123 = vmatprep.subr.bf16.mxu0 0
    %124 = vmatpush1.bf16.msra.mxu0 0
    %125 = vmatprep.subr.bf16.mxu0 0
    %126 = vmatpush1.bf16.msra.mxu0 0
    %127 = vmatprep.subr.bf16.mxu0 0
    %128 = vmatpush1.bf16.msra.mxu0 0
    %129 = vmatprep.subr.bf16.mxu0 0
    %130 = vmatpush1.bf16.msra.mxu0 0
    %131 = vmatprep.subr.bf16.mxu0 0
    %132 = vmatpush1.bf16.msra.mxu0 0
    %133 = vmatprep.mubr.bf16.mxu0 0
    %134 = vmatmul.mubr.bf16.gmra.mrb[0].mxu0 %v29
    %v135 = vpop.f32.mrb[0].mxu0
    %v136 = vadd.f32 %v51, %v135
    %v137 = vpop.f32.mrb[0].mxu0
    %v138 = vpop.f32.mrb[0].mxu0
    %v139 = vpop.f32.mrb[0].mxu0
    %140 = vdwg.mxu0
    %141 = vst [vmem:[%s3] sm:$0xff] %v136
    // Predicated region
    $region18: #{hac_forward.1} parent=1 // pred_check
      _
    $region19: #{hac_forward.1} parent=1 // pred_check_branch
      %143 = sbr.rel (0) target = $region21
    $region20: #{hac_forward.1} parent=1 // pred_region
      _
    $region21: #{hac_forward.1} parent=1 // pred_fallthru
      _
    // Predicated region
    $region22: #{hac_forward.1} parent=1 // pred_check
      _
    $region23: #{hac_forward.1} parent=1 // pred_check_branch
      %145 = sbr.rel (0) target = $region25
    $region24: #{hac_forward.1} parent=1 // pred_region
      _
    $region25: #{hac_forward.1} parent=1 // pred_fallthru
      _
    %146 = vsyncpa [#allocation3], 1

</llo_original>
